<compile_context>
chip_gen: v6e
topology: v6e:2x2x1
jax: 0.10.0
libtpu: 0.0.40
codegen_flags: <defaults>
</compile_context>

<pallas_src>
import numpy as np
import jax
import jax.numpy as jnp
from jax.experimental import pallas as pl
from jax.experimental.pallas import tpu as pltpu

LANE = 128
SUBLANE = 8
# Largest row-tile: 2048 rows = 1 MiB f32 per block.  2 inputs + 1 output,
# double-buffered, is ~6 MiB -> comfortably under every generation's default
# scoped-VMEM limit (16 MiB v5e, 32 MiB v6e/v7x).
MAX_TILE_ROWS = 2048
# Only split a slab into multiple grid steps when each step still gets at
# least this many rows (0.5 MiB f32); below that the ~0.35 us/step pipeline
# overhead outweighs the v7x two-TensorCore sharding benefit.
MIN_TILE_ROWS_PER_STEP = 1024


def _ceil_to(x, m):
    return -(-x // m) * m


def _pwnet_kernel(left_ref, dist_ref, cl_ref, cr_ref, out_ref):
    # `left_ref` only drives the index_maps; `dist` is precomputed in the
    # wrapper so the body is a pure lerp on full-vreg tiles.
    del left_ref
    dist = dist_ref[0]
    cl = cl_ref[0].astype(jnp.float32)
    cr = cr_ref[0].astype(jnp.float32)
    out_ref[...] = cl * dist + (1.0 - dist) * cr


def pack_const(const, size, dtype=jnp.float32):
    """Pack const [kernel_num, *size] into a lane/sublane-dense
    [kernel_num, R, 128] slab (done once, outside the forward).

    Optionally store as bfloat16 (dtype=jnp.bfloat16) to halve read traffic on
    this bandwidth-bound op; compute and output stay float32 (cast happens
    right after load, so it is safe on v5e which has no bf16 VALU).
    """
    kernel_num = const.shape[0]
    assert kernel_num >= 2, "PWNet needs kernel_num >= 2 (const[left] and const[left+1] are both read)"
    n = int(np.prod(size))
    rows = _ceil_to(-(-n // LANE), SUBLANE)          # ceil(n/128), sublane multiple
    if rows >= 2 * MIN_TILE_ROWS_PER_STEP:
        # Big slab: >= 2 (even) grid steps so v7x can shard across both
        # TensorCores, with tiles as large as possible (<= MAX_TILE_ROWS).
        steps = max(2, -(-rows // MAX_TILE_ROWS))
        steps += steps % 2
        tile_rows = _ceil_to(-(-rows // steps), SUBLANE)
    else:
        tile_rows = rows                              # one big tile, grid = (1,)
    rows = _ceil_to(rows, tile_rows)
    n_pad = rows * LANE
    flat = jnp.asarray(const, jnp.float32).reshape(kernel_num, n)
    flat = jnp.pad(flat, ((0, 0), (0, n_pad - n)))
    return flat.reshape(kernel_num, rows, LANE).astype(dtype), tile_rows


def pwnet_forward(lam, const_packed, pivots, size, tile_rows):
    """const_packed: [kernel_num, R, 128], pivots: [kernel_num] f32, lam: scalar.
    Returns a float32 array of shape `size`.

    Note: `left` is clamped to [0, kernel_num-2]; for lam in [0, 1] this matches
    the PyTorch forward exactly, for lam > 1 it extrapolates with the last
    interval instead of indexing out of bounds."""
    kernel_num, rows, _ = const_packed.shape
    assert kernel_num >= 2
    n = int(np.prod(size))

    lam_ = jnp.asarray(lam, jnp.float32) * 0.99999
    pivots = jnp.asarray(pivots, jnp.float32)
    left = jnp.clip(jnp.floor(lam_ * (kernel_num - 1)).astype(jnp.int32),
                    0, kernel_num - 2)
    right = left + 1
    dist = (pivots[right] - lam_) / (pivots[right] - pivots[left])

    left_arr = left.reshape(1)
    dist_arr = dist.astype(jnp.float32).reshape(1)

    grid = (rows // tile_rows,)
    block_bytes = tile_rows * LANE * 4
    in_bytes = rows * LANE * jnp.dtype(const_packed.dtype).itemsize
    out_bytes = rows * LANE * 4

    out = pl.pallas_call(
        _pwnet_kernel,
        out_shape=jax.ShapeDtypeStruct((rows, LANE), jnp.float32),
        grid_spec=pltpu.PrefetchScalarGridSpec(
            num_scalar_prefetch=2,
            grid=grid,
            in_specs=[
                # const[left] row-tile
                pl.BlockSpec((1, tile_rows, LANE),
                             lambda i, l, d: (l[0], i, 0)),
                # const[left + 1] row-tile
                pl.BlockSpec((1, tile_rows, LANE),
                             lambda i, l, d: (l[0] + 1, i, 0)),
            ],
            out_specs=pl.BlockSpec((tile_rows, LANE),
                                   lambda i, l, d: (i, 0)),
        ),
        compiler_params=pltpu.CompilerParams(
            dimension_semantics=("parallel",),
            # Explicit limit so enlarged tiles never trip v5e's smaller
            # (16 MiB) default scoped-VMEM budget.
            vmem_limit_bytes=int(max(16 << 20, 8 * block_bytes)),
        ),
        cost_estimate=pl.CostEstimate(
            flops=3 * rows * LANE,
            transcendentals=0,
            bytes_accessed=2 * in_bytes + out_bytes,
        ),
    )(left_arr, dist_arr, const_packed, const_packed)

    if n == rows * LANE:
        # No padding -> no post-kernel unpad copy.
        return out.reshape(size)
    # TODO(synk): let downstream consume the packed (R, 128) slab directly to
    # avoid this extra unpad pass for padded shapes.
    return out.reshape(-1)[:n].reshape(size)


def pwnet_forward_xla(lam, const, pivots):
    """Plain-XLA fallback for tiny PWNet tensors (n ~< 1e4) where pallas_call
    launch + scalar-prefetch overhead dominates the bytes actually moved."""
    kernel_num = const.shape[0]
    lam_ = jnp.asarray(lam, jnp.float32) * 0.99999
    left = jnp.clip(jnp.floor(lam_ * (kernel_num - 1)).astype(jnp.int32),
                    0, kernel_num - 2)
    right = left + 1
    dist = (pivots[right] - lam_) / (pivots[right] - pivots[left])
    cl = jax.lax.dynamic_index_in_dim(const, left, 0, keepdims=False)
    cr = jax.lax.dynamic_index_in_dim(const, right, 0, keepdims=False)
    return cl * dist + (1.0 - dist) * cr


def init_pwnet(key, size, kernel_num):
    """Deterministic parameter init mirroring PWNet.__init__ (init_='random')."""
    if not isinstance(size, tuple):
        size = (size,)
    k1, _ = jax.random.split(key)
    total = (kernel_num,) + size
    if len(size) > 1:
        # kaiming_uniform_(a=sqrt(5)) style bound
        fan_in = int(np.prod(size[1:]))
        gain = np.sqrt(2.0 / (1.0 + 5.0))
        bound = gain * np.sqrt(3.0 / fan_in)
        const = jax.random.uniform(k1, total, jnp.float32, -bound, bound)
    else:
        const = jax.random.normal(k1, total, dtype=jnp.float32)
    pivots = jnp.linspace(0.0, 1.0, kernel_num).astype(jnp.float32)
    return const, pivots, size


def pwnet_reference(lam, const, pivots, kernel_num):
    """Pure-JAX reference matching the PyTorch forward."""
    lam_ = lam * 0.99999
    left = jnp.floor(lam_ * (kernel_num - 1)).astype(jnp.int32)
    right = left + 1
    dist = (pivots[right] - lam_) / (pivots[right] - pivots[left])
    return const[left] * dist + (1.0 - dist) * const[right]


if __name__ == "__main__":
    key = jax.random.PRNGKey(0)
    kernel_num = 5
    lam = jnp.float32(0.37)

    fwd = jax.jit(pwnet_forward, static_argnames=("size", "tile_rows"))

    # Test 1: small conv-weight-shaped output (n = 144) — exercises padding
    # and the single-step grid path.
    size1 = (4, 4, 3, 3)
    const1, pivots1, size1 = init_pwnet(key, size1, kernel_num)
    const1_packed, tile_rows1 = pack_const(const1, size1)
    out1 = jax.block_until_ready(fwd(lam, const1_packed, pivots1, size1, tile_rows1))
    ref1 = pwnet_reference(lam, const1, pivots1, kernel_num)
    assert out1.shape == size1
    np.testing.assert_allclose(np.asarray(out1), np.asarray(ref1),
                               rtol=1e-6, atol=1e-6)

    # Test 2: slab big enough (n = 262144 -> 2048 rows) to exercise the
    # multi-step (even, >= 2) grid that v7x shards across both TensorCores,
    # with no lane padding and no post-kernel unpad copy.
    size2 = (64, 64, 64)
    const2, pivots2, size2 = init_pwnet(jax.random.PRNGKey(1), size2, kernel_num)
    const2_packed, tile_rows2 = pack_const(const2, size2)
    assert const2_packed.shape[1] // tile_rows2 >= 2  # multi-step, even grid
    out2 = jax.block_until_ready(fwd(lam, const2_packed, pivots2, size2, tile_rows2))
    ref2 = pwnet_reference(lam, const2, pivots2, kernel_num)
    assert out2.shape == size2
    np.testing.assert_allclose(np.asarray(out2), np.asarray(ref2),
                               rtol=1e-6, atol=1e-6)

    # Test 3: plain-XLA fallback path for tiny tensors matches the reference.
    out3 = jax.block_until_ready(jax.jit(pwnet_forward_xla)(lam, const1, pivots1))
    np.testing.assert_allclose(np.asarray(out3), np.asarray(ref1),
                               rtol=1e-6, atol=1e-6)

    print("KERNEL_OK")
</pallas_src>

<mosaic_0001>
module attributes {stable_mosaic.version = 11 : i64} {
  func.func @_pwnet_kernel(%arg0: i32, %arg1: memref<1xi32, #tpu.memory_space<smem>>, %arg2: memref<1xf32, #tpu.memory_space<smem>>, %arg3: memref<1x8x128xf32, #tpu.memory_space<vmem>>, %arg4: memref<1x8x128xf32, #tpu.memory_space<vmem>>, %arg5: memref<8x128xf32, #tpu.memory_space<vmem>>) attributes {dimension_semantics = [#tpu.dimension_semantics<parallel>], iteration_bounds = array<i64: 1>, scalar_prefetch = 2 : i64, scratch_operands = 0 : i64, tpu.core_type = #tpu.core_type<tc>, window_params = [{transform_indices = @transform_0, window_bounds = array<i64: 1, 8, 128>}, {transform_indices = @transform_1, window_bounds = array<i64: 1, 8, 128>}, {transform_indices = @transform_2, window_bounds = array<i64: 8, 128>}]} {
    %c0 = arith.constant 0 : index
    %0 = memref.load %arg2[%c0] : memref<1xf32, #tpu.memory_space<smem>>
    %c0_0 = arith.constant 0 : index
    %c0_1 = arith.constant 0 : index
    %c0_2 = arith.constant 0 : index
    %1 = vector.load %arg3[%c0_0, %c0_1, %c0_2] : memref<1x8x128xf32, #tpu.memory_space<vmem>>, vector<1x8x128xf32>
    %2 = vector.shape_cast %1 : vector<1x8x128xf32> to vector<8x128xf32>
    %c0_3 = arith.constant 0 : index
    %c0_4 = arith.constant 0 : index
    %c0_5 = arith.constant 0 : index
    %3 = vector.load %arg4[%c0_3, %c0_4, %c0_5] : memref<1x8x128xf32, #tpu.memory_space<vmem>>, vector<1x8x128xf32>
    %4 = vector.shape_cast %3 : vector<1x8x128xf32> to vector<8x128xf32>
    %5 = vector.broadcast %0 : f32 to vector<8x128xf32>
    %6 = arith.mulf %2, %5 : vector<8x128xf32>
    %cst = arith.constant 1.000000e+00 : f32
    %7 = arith.subf %cst, %0 : f32
    %8 = vector.broadcast %7 : f32 to vector<8x128xf32>
    %9 = arith.mulf %8, %4 : vector<8x128xf32>
    %10 = arith.addf %6, %9 : vector<8x128xf32>
    %c0_6 = arith.constant 0 : index
    %c0_7 = arith.constant 0 : index
    %11 = vector.load %arg5[%c0_6, %c0_7] : memref<8x128xf32, #tpu.memory_space<vmem>>, vector<8x128xf32>
    tpu.vector_store %arg5[%c0_6, %c0_7], %10 {strides = array<i32>} : memref<8x128xf32, #tpu.memory_space<vmem>>, vector<8x128xf32>,
    return
  }
  func.func @transform_0(%arg0: i32, %arg1: memref<1xi32, #tpu.memory_space<smem>>, %arg2: memref<1xf32, #tpu.memory_space<smem>>) -> (i32, i32, i32) {
    %c0 = arith.constant 0 : index
    %0 = memref.load %arg1[%c0] : memref<1xi32, #tpu.memory_space<smem>>
    %c0_i32 = arith.constant 0 : i32
    %c0_i32_0 = arith.constant 0 : i32
    return %0, %arg0, %c0_i32 : i32, i32, i32
  }
  func.func @transform_1(%arg0: i32, %arg1: memref<1xi32, #tpu.memory_space<smem>>, %arg2: memref<1xf32, #tpu.memory_space<smem>>) -> (i32, i32, i32) {
    %c0 = arith.constant 0 : index
    %0 = memref.load %arg1[%c0] : memref<1xi32, #tpu.memory_space<smem>>
    %c1_i32 = arith.constant 1 : i32
    %1 = arith.addi %0, %c1_i32 : i32
    %c0_i32 = arith.constant 0 : i32
    %c0_i32_0 = arith.constant 0 : i32
    return %1, %arg0, %c0_i32 : i32, i32, i32
  }
  func.func @transform_2(%arg0: i32, %arg1: memref<1xi32, #tpu.memory_space<smem>>, %arg2: memref<1xf32, #tpu.memory_space<smem>>) -> (i32, i32) {
    %c0_i32 = arith.constant 0 : i32
    %c0_i32_0 = arith.constant 0 : i32
    return %arg0, %c0_i32 : i32, i32
  }
}

</mosaic_0001>

<llo_original>
// kernel: pwnet_forward.1
$region0: #{pwnet_forward.1}
  #allocation0 [shape = 'u32[]', space=smem, size = 0x4, offset = 0x4, fixed_abs, tag = 'smem constant byte address 0x4 - core index']
  #allocation1 [shape = 'u32[144,128]{1,0:T(1,128)}', space=vmem, size = 0x12000, scoped, tag = 'internal scratch']
  #allocation2 [shape = 's32[1]{0}', space=sflag, size = 0x4, scoped, tag = 'scoped memory for pwnet_forward.1']
  #allocation3 [shape = 's32[1]{0:T(128)S(6)}', space=smem, size = 0x200, scoped, tag = 'prefetched SMEM operand 0']
  #allocation4 [shape = 'f32[1]{0:T(128)S(6)}', space=smem, size = 0x200, scoped, tag = 'prefetched SMEM operand 1']
  %s0 = inlined_call_operand.<no memory space> [shape: s32[1], index: 0, kind: input, shape index: {}]
  %s1 = inlined_call_operand.<no memory space> [shape: f32[1], index: 1, kind: input, shape index: {}]
  %s2 = inlined_call_operand.vmem [shape: f32[5,8,128], index: 2, kind: input, shape index: {}, may-alias: {2,3}]
  %s3 = inlined_call_operand.vmem [shape: f32[5,8,128], index: 3, kind: input, shape index: {}, may-alias: {2,3}]
  %s4 = inlined_call_operand.vmem [shape: f32[8,128], index: 4, kind: output, shape index: {}]
  %s5 = sld [smem:[#allocation0]]
  $region18: #{pwnet_forward.1} parent=0
    _
  %s7 = ssub.s32 1, %s5
  %s8 = scalar_select 0, %s7, %s5
  %9 = sst [smem:[#allocation3]] %s0
  %10 = sst [smem:[#allocation4]] %s1
  // Predicated region
  $region2: #{pwnet_forward.1} parent=0 // pred_check
    _
  $region3: #{pwnet_forward.1} parent=0 // pred_check_branch
    %12 = sbr.rel (0) target = $region5
  $region4: #{pwnet_forward.1} parent=0 // pred_region
    %s13 = sld [smem:[#allocation3]]
    %p14 = scmp.lt.s32.totalorder %s13, 4
    %s15 = scalar_select %p14, %s13, 4
    %s16 = smul.addr %s15, 8
    %s17 = scalar_lea.vmem %s2, %s16
    %s18 = sld [smem:[#allocation3]]
  $region5: #{pwnet_forward.1} parent=0 // pred_fallthru
    _
  // Predicated region
  $region6: #{pwnet_forward.1} parent=0 // pred_check
    _
  $region7: #{pwnet_forward.1} parent=0 // pred_check_branch
    %20 = sbr.rel (0) target = $region9
  $region8: #{pwnet_forward.1} parent=0 // pred_region
    %s21 = sld [smem:[#allocation3]]
    %s22 = sadd.s32 %s21, 1
    %p23 = scmp.lt.s32.totalorder %s22, 4
    %s24 = scalar_select %p23, %s22, 4
    %s25 = smul.addr %s24, 8
    %s26 = scalar_lea.vmem %s3, %s25
    %s27 = sld [smem:[#allocation3]]
    %s28 = sadd.s32 %s27, 1
  $region9: #{pwnet_forward.1} parent=0 // pred_fallthru
    _
  %s29 = sld [smem:[#allocation3]]
  %p30 = scmp.lt.s32.totalorder %s29, 4
  %s31 = scalar_select %p30, %s29, 4
  %s32 = smul.addr %s31, 8
  %s33 = scalar_lea.vmem %s2, %s32
  %s34 = sld [smem:[#allocation3]]
  %s35 = sadd.s32 %s34, 1
  %p36 = scmp.lt.s32.totalorder %s35, 4
  %s37 = scalar_select %p36, %s35, 4
  %s38 = smul.addr %s37, 8
  %s39 = scalar_lea.vmem %s3, %s38
  %s40 = sld [smem:[#allocation3]]
  %p41 = scmp.lt.s32.totalorder %s40, 4
  %s42 = scalar_select %p41, %s40, 4
  %s43 = smul.addr %s42, 8
  %s44 = scalar_lea.vmem %s2, %s43
  %s45 = sld [smem:[#allocation3]]
  %s46 = sld [smem:[#allocation3]]
  %s47 = sadd.s32 %s46, 1
  %p48 = scmp.lt.s32.totalorder %s47, 4
  %s49 = scalar_select %p48, %s47, 4
  %s50 = smul.addr %s49, 8
  %s51 = scalar_lea.vmem %s3, %s50
  %s52 = sld [smem:[#allocation3]]
  %s53 = sadd.s32 %s52, 1
  %s54 = sld [smem:[#allocation4]]
  %v55 = vld [vmem:[%s44] sm:$0xff]
  %v56 = vld [vmem:[%s51] sm:$0xff]
  %v57 = vstv %s54
  %v58 = vmul.f32 %v55, %v57
  %s59 = ssub.f32 1.0, %s54
  %v60 = vstv %s59
  %v61 = vmul.f32 %v60, %v56
  %v62 = vadd.f32 %v58, %v61
  %63 = vst [vmem:[%s4] sm:$0xff] %v62
  // Predicated region
  $region10: #{pwnet_forward.1} parent=0 // pred_check
    _
  $region11: #{pwnet_forward.1} parent=0 // pred_check_branch
    %65 = sbr.rel (0) target = $region13
  $region12: #{pwnet_forward.1} parent=0 // pred_region
    _
  $region13: #{pwnet_forward.1} parent=0 // pred_fallthru
    _
  // Predicated region
  $region14: #{pwnet_forward.1} parent=0 // pred_check
    _
  $region15: #{pwnet_forward.1} parent=0 // pred_check_branch
    %67 = sbr.rel (0) target = $region17
  $region16: #{pwnet_forward.1} parent=0 // pred_region
    _
  $region17: #{pwnet_forward.1} parent=0 // pred_fallthru
    _

</llo_original>
